<compile_context>
chip_gen: v6e
topology: v6e:2x2x1
jax: 0.10.0
libtpu: 0.0.40
codegen_flags: <defaults>
</compile_context>

<pallas_src>
import functools

import jax
import jax.numpy as jnp
from jax.experimental import pallas as pl
from jax.experimental.pallas import tpu as pltpu


_TB_MAX = 4096  # packed (lane-dense) rows per batch tile


def _round_up(n: int, m: int) -> int:
    return ((n + m - 1) // m) * m


def _cdiv(a: int, b: int) -> int:
    return -(-a // b)


# ----------------------------------------------------------------------------
# Function system (glue, plain JAX): Gaussian basis parameterized by
# params = [log_sigma, shift].  Returns (phi, dphi) like FunSystem.__call__.
# ----------------------------------------------------------------------------
def make_gaussian_fun_system(num_coeffs: int, num_samples: int):
    t = jnp.linspace(-1.0, 1.0, num_samples, dtype=jnp.float32)          # (S,)
    centers = jnp.linspace(-0.8, 0.8, num_coeffs, dtype=jnp.float32)     # (C,)

    def phi_of(params):
        sigma = jnp.exp(params[0])
        shift = params[1]
        # phi[k, n] = exp(-((t_n - shift - c_k) / sigma)^2)
        z = (t[None, :] - shift - centers[:, None]) / sigma
        return jnp.exp(-(z ** 2)).astype(jnp.float32)                    # (C, S)

    def fun_system(params):
        phi = phi_of(params)
        # dphi[p, k, n] = d phi[k, n] / d params[p]   (only used by backward)
        dphi = jax.jacfwd(phi_of)(params)                                # (C, S, P)
        dphi = jnp.moveaxis(dphi, -1, 0)                                 # (P, C, S)
        return phi, dphi

    return fun_system


# ----------------------------------------------------------------------------
# Pallas kernel: VP projection hot path, one lane-packed batch tile per step.
#   x_ref    : (TB, L)        L = R * S   (R logical rows packed per lane row)
#   rhs_ref  : (L, L + R*C)   [block_diag(P) | block_diag(phip)]
#   ind_ref  : (L, R)         block indicator for the per-logical-row r2 sum
# ----------------------------------------------------------------------------
def _vp_kernel(x_ref, rhs_ref, ind_ref,
               xhat_ref, coeffs_ref, res_ref, r2_ref):
    x = x_ref[...]                                                       # (TB, L)
    l = x_ref.shape[-1]
    # Single fused MXU pass: [x @ P_blk | x @ phip_blk]
    fused = jnp.dot(x, rhs_ref[...],
                    preferred_element_type=jnp.float32)                  # (TB, L+R*C)
    x_hat = fused[:, :l]                                                 # (TB, L)
    res = x - x_hat                                                      # (TB, L)

    xhat_ref[...] = x_hat
    coeffs_ref[...] = fused[:, l:]                                       # (TB, R*C)
    res_ref[...] = res
    # Per-logical-row squared residual norm via block-indicator matmul.
    r2_ref[...] = jnp.dot(res * res, ind_ref[...],
                          preferred_element_type=jnp.float32)            # (TB, R)


def _choose_tiling(bp: int) -> tuple[int, int]:
    """Pick (tb, num_tiles) over packed rows.

    tb is a multiple of 8 (sublane); padding is bounded by ~8*num_tiles rows.
    For non-trivial batches we force an even tile count >= 2 so the
    ("parallel",) grid axis can shard across v7x's two TensorCores and the
    BlockSpec double-buffering has something to overlap.
    """
    if bp <= 16:
        return _round_up(max(bp, 1), 8), 1
    num_tiles = max(2, _cdiv(bp, _TB_MAX))
    if num_tiles % 2:
        num_tiles += 1
    tb = _round_up(_cdiv(bp, num_tiles), 8)
    return tb, num_tiles


@functools.partial(jax.jit, static_argnums=(3, 4, 5, 6, 7, 8))
def _vp_project(x2d, rhs, ind, tb, num_tiles, bp_pad, r, c, s):
    """x2d: (b, s) -> packed projection outputs over bp_pad*r padded rows."""
    b = x2d.shape[0]
    l = r * s
    rc = r * c
    b_rows = bp_pad * r

    x_p = x2d if b == b_rows else jnp.pad(x2d, ((0, b_rows - b), (0, 0)))
    x_packed = x_p.reshape(bp_pad, l)        # row-major reinterpretation, lane-dense

    flops = 2 * bp_pad * l * (l + rc + r) + 2 * bp_pad * l
    bytes_accessed = 4 * (bp_pad * (3 * l + rc + r) + l * (l + rc + r))

    out_shapes = (
        jax.ShapeDtypeStruct((bp_pad, l), jnp.float32),    # x_hat (packed)
        jax.ShapeDtypeStruct((bp_pad, rc), jnp.float32),   # coeffs (packed)
        jax.ShapeDtypeStruct((bp_pad, l), jnp.float32),    # res (packed)
        jax.ShapeDtypeStruct((bp_pad, r), jnp.float32),    # r2 (packed)
    )

    x_hat_p, coeffs_p, res_p, r2_p = pl.pallas_call(
        _vp_kernel,
        out_shape=out_shapes,
        grid=(num_tiles,),
        in_specs=[
            pl.BlockSpec((tb, l), lambda i: (i, 0)),       # x tile (lane-dense)
            pl.BlockSpec((l, l + rc), lambda i: (0, 0)),   # fused [P | phip] constant
            pl.BlockSpec((l, r), lambda i: (0, 0)),        # r2 block indicator
        ],
        out_specs=(
            pl.BlockSpec((tb, l), lambda i: (i, 0)),
            pl.BlockSpec((tb, rc), lambda i: (i, 0)),
            pl.BlockSpec((tb, l), lambda i: (i, 0)),
            pl.BlockSpec((tb, r), lambda i: (i, 0)),
        ),
        compiler_params=pltpu.CompilerParams(
            dimension_semantics=("parallel",),             # megacore sharding on v7x
            vmem_limit_bytes=48 * 1024 * 1024),            # ~20 MiB needed at tb=4096
        cost_estimate=pl.CostEstimate(
            flops=flops, transcendentals=0, bytes_accessed=bytes_accessed),
    )(x_packed, rhs, ind)

    # Reinterpret packed outputs back to one logical row per array row.
    coeffs = coeffs_p.reshape(b_rows, c)
    x_hat = x_hat_p.reshape(b_rows, s)
    res = res_p.reshape(b_rows, s)
    r2 = r2_p.reshape(b_rows)
    return coeffs, x_hat, res, r2


# ----------------------------------------------------------------------------
# VPLayer equivalent (forward only; parameters built deterministically).
# ----------------------------------------------------------------------------
class VPLayerPallas:
    def __init__(self, params_init: jnp.ndarray, fun_system):
        self.params = jnp.asarray(params_init, dtype=jnp.float32)
        self.fun_system = fun_system
        # Hoisted out of the per-call path: params are fixed for forward-only
        # inference, so the basis, its pseudo-inverse (SVD) and the packed
        # projection constants are computed once here, not on every call.
        phi, _dphi = fun_system(self.params)                             # (C, S)
        phi = jnp.asarray(phi, jnp.float32)
        phip = jnp.linalg.pinv(phi).astype(jnp.float32)                  # (S, C)
        c, s = map(int, phi.shape)
        self._phi, self._phip = phi, phip
        self._num_coeffs, self._num_samples = c, s

        # Lane-packing factor: pack R logical rows per 128-lane row when possible.
        r = 128 // s if (s < 128 and 128 % s == 0) else 1
        self._r = r

        proj = jnp.matmul(phip, phi, precision=jax.lax.Precision.HIGHEST)  # (S, S)
        eye_r = jnp.eye(r, dtype=jnp.float32)
        p_blk = jnp.kron(eye_r, proj)                                    # (R*S, R*S)
        phip_blk = jnp.kron(eye_r, phip)                                 # (R*S, R*C)
        self._rhs = jnp.concatenate([p_blk, phip_blk], axis=1)           # (R*S, R*S+R*C)
        self._ind = jnp.kron(eye_r, jnp.ones((s, 1), jnp.float32))       # (R*S, R)
        # TODO(synk): VPFun.backward (analytic d_params / dx) is not implemented;
        # forward-pass only, matching the requested scope.

    def __call__(self, x):
        x = jnp.asarray(x, dtype=jnp.float32)
        s, c, r = self._num_samples, self._num_coeffs, self._r

        lead = x.shape[:-1]
        x2d = x.reshape((-1, s))
        b = int(x2d.shape[0])

        bp = _cdiv(max(b, 1), r)                 # packed rows needed
        tb, num_tiles = _choose_tiling(bp)
        bp_pad = tb * num_tiles

        coeffs, x_hat, res, r2 = _vp_project(
            x2d, self._rhs, self._ind,
            int(tb), int(num_tiles), int(bp_pad), int(r), int(c), int(s))

        return (coeffs[:b].reshape(lead + (c,)),
                x_hat[:b].reshape(lead + (s,)),
                res[:b].reshape(lead + (s,)),
                r2[:b].reshape(lead))


# ----------------------------------------------------------------------------
# Demo / self-check
# ----------------------------------------------------------------------------
if __name__ == "__main__":
    key = jax.random.PRNGKey(0)

    batch, extra, num_samples = 2, 3, 32
    num_coeffs = 6
    # params = [log_sigma, shift], deterministic init
    params_init = jnp.array([jnp.log(0.3), 0.05], dtype=jnp.float32)

    fun_system = make_gaussian_fun_system(num_coeffs, num_samples)
    layer = VPLayerPallas(params_init, fun_system)

    x = jax.random.normal(key, (batch, extra, num_samples), dtype=jnp.float32)

    coeffs, x_hat, res, r2 = layer(x)
    jax.block_until_ready((coeffs, x_hat, res, r2))

    # Pure-JAX reference check (mirrors the PyTorch VPFun.forward exactly)
    phi_ref, _ = fun_system(layer.params)
    phip_ref = jnp.linalg.pinv(phi_ref)
    coeffs_ref = x @ phip_ref
    xhat_ref = coeffs_ref @ phi_ref
    res_ref = x - xhat_ref
    r2_ref = jnp.sum(res_ref ** 2, axis=-1)

    assert coeffs.shape == (batch, extra, num_coeffs)
    assert x_hat.shape == (batch, extra, num_samples)
    assert res.shape == (batch, extra, num_samples)
    assert r2.shape == (batch, extra)
    assert jnp.allclose(coeffs, coeffs_ref, atol=1e-3, rtol=1e-3)
    assert jnp.allclose(x_hat, xhat_ref, atol=1e-3, rtol=1e-3)
    assert jnp.allclose(res, res_ref, atol=1e-3, rtol=1e-3)
    assert jnp.allclose(r2, r2_ref, atol=1e-2, rtol=1e-3)

    print("KERNEL_OK")
</pallas_src>

<mosaic_0001>
module attributes {stable_mosaic.version = 11 : i64} {
  func.func @_vp_kernel(%arg0: i32, %arg1: memref<8x128xf32, #tpu.memory_space<vmem>>, %arg2: memref<128x152xf32, #tpu.memory_space<vmem>>, %arg3: memref<128x4xf32, #tpu.memory_space<vmem>>, %arg4: memref<8x128xf32, #tpu.memory_space<vmem>>, %arg5: memref<8x24xf32, #tpu.memory_space<vmem>>, %arg6: memref<8x128xf32, #tpu.memory_space<vmem>>, %arg7: memref<8x4xf32, #tpu.memory_space<vmem>>) attributes {dimension_semantics = [#tpu.dimension_semantics<parallel>], iteration_bounds = array<i64: 1>, scalar_prefetch = 0 : i64, scratch_operands = 0 : i64, tpu.core_type = #tpu.core_type<tc>, window_params = [{transform_indices = @transform_0, window_bounds = array<i64: 8, 128>}, {pipeline_mode = #tpu.pipeline_mode<synchronous>, transform_indices = @transform_1, window_bounds = array<i64: 128, 152>}, {pipeline_mode = #tpu.pipeline_mode<synchronous>, transform_indices = @transform_2, window_bounds = array<i64: 128, 4>}, {transform_indices = @transform_3, window_bounds = array<i64: 8, 128>}, {transform_indices = @transform_4, window_bounds = array<i64: 8, 24>}, {transform_indices = @transform_5, window_bounds = array<i64: 8, 128>}, {transform_indices = @transform_6, window_bounds = array<i64: 8, 4>}]} {
    %c0 = arith.constant 0 : index
    %c0_0 = arith.constant 0 : index
    %0 = vector.load %arg1[%c0, %c0_0] : memref<8x128xf32, #tpu.memory_space<vmem>>, vector<8x128xf32>
    %c0_1 = arith.constant 0 : index
    %c0_2 = arith.constant 0 : index
    %1 = vector.load %arg2[%c0_1, %c0_2] : memref<128x152xf32, #tpu.memory_space<vmem>>, vector<128x152xf32>
    %cst = arith.constant dense<0.000000e+00> : vector<8x152xf32>
    %2 = tpu.matmul %0, %1, %cst {dimension_numbers = #tpu.dot_dimension_numbers<[1], [0], [0], [1], [0, 0, 1, 1], [], []>} : vector<8x128xf32>, vector<128x152xf32>, vector<8x152xf32> -> vector<8x152xf32>
    %3 = vector.extract_strided_slice %2 {offsets = [0, 0], sizes = [8, 128], strides = [1, 1]} : vector<8x152xf32> to vector<8x128xf32>
    %4 = arith.subf %0, %3 : vector<8x128xf32>
    %c0_3 = arith.constant 0 : index
    %c0_4 = arith.constant 0 : index
    %5 = vector.load %arg4[%c0_3, %c0_4] : memref<8x128xf32, #tpu.memory_space<vmem>>, vector<8x128xf32>
    tpu.vector_store %arg4[%c0_3, %c0_4], %3 {strides = array<i32>} : memref<8x128xf32, #tpu.memory_space<vmem>>, vector<8x128xf32>,
    %6 = vector.extract_strided_slice %2 {offsets = [0, 128], sizes = [8, 24], strides = [1, 1]} : vector<8x152xf32> to vector<8x24xf32>
    %c0_5 = arith.constant 0 : index
    %c0_6 = arith.constant 0 : index
    %7 = vector.load %arg5[%c0_5, %c0_6] : memref<8x24xf32, #tpu.memory_space<vmem>>, vector<8x24xf32>
    tpu.vector_store %arg5[%c0_5, %c0_6], %6 {strides = array<i32>} : memref<8x24xf32, #tpu.memory_space<vmem>>, vector<8x24xf32>,
    %c0_7 = arith.constant 0 : index
    %c0_8 = arith.constant 0 : index
    %8 = vector.load %arg6[%c0_7, %c0_8] : memref<8x128xf32, #tpu.memory_space<vmem>>, vector<8x128xf32>
    tpu.vector_store %arg6[%c0_7, %c0_8], %4 {strides = array<i32>} : memref<8x128xf32, #tpu.memory_space<vmem>>, vector<8x128xf32>,
    %9 = arith.mulf %4, %4 : vector<8x128xf32>
    %c0_9 = arith.constant 0 : index
    %c0_10 = arith.constant 0 : index
    %10 = vector.load %arg3[%c0_9, %c0_10] : memref<128x4xf32, #tpu.memory_space<vmem>>, vector<128x4xf32>
    %cst_11 = arith.constant dense<0.000000e+00> : vector<8x4xf32>
    %11 = tpu.matmul %9, %10, %cst_11 {dimension_numbers = #tpu.dot_dimension_numbers<[1], [0], [0], [1], [0, 0, 1, 1], [], []>} : vector<8x128xf32>, vector<128x4xf32>, vector<8x4xf32> -> vector<8x4xf32>
    %c0_12 = arith.constant 0 : index
    %c0_13 = arith.constant 0 : index
    %12 = vector.load %arg7[%c0_12, %c0_13] : memref<8x4xf32, #tpu.memory_space<vmem>>, vector<8x4xf32>
    tpu.vector_store %arg7[%c0_12, %c0_13], %11 {strides = array<i32>} : memref<8x4xf32, #tpu.memory_space<vmem>>, vector<8x4xf32>,
    return
  }
  func.func @transform_0(%arg0: i32) -> (i32, i32) {
    %c0_i32 = arith.constant 0 : i32
    %c0_i32_0 = arith.constant 0 : i32
    return %arg0, %c0_i32 : i32, i32
  }
  func.func @transform_1(%arg0: i32) -> (i32, i32) {
    %c0_i32 = arith.constant 0 : i32
    %c0_i32_0 = arith.constant 0 : i32
    %c0_i32_1 = arith.constant 0 : i32
    return %c0_i32, %c0_i32_0 : i32, i32
  }
  func.func @transform_2(%arg0: i32) -> (i32, i32) {
    %c0_i32 = arith.constant 0 : i32
    %c0_i32_0 = arith.constant 0 : i32
    %c0_i32_1 = arith.constant 0 : i32
    return %c0_i32, %c0_i32_0 : i32, i32
  }
  func.func @transform_3(%arg0: i32) -> (i32, i32) {
    %c0_i32 = arith.constant 0 : i32
    %c0_i32_0 = arith.constant 0 : i32
    return %arg0, %c0_i32 : i32, i32
  }
  func.func @transform_4(%arg0: i32) -> (i32, i32) {
    %c0_i32 = arith.constant 0 : i32
    %c0_i32_0 = arith.constant 0 : i32
    return %arg0, %c0_i32 : i32, i32
  }
  func.func @transform_5(%arg0: i32) -> (i32, i32) {
    %c0_i32 = arith.constant 0 : i32
    %c0_i32_0 = arith.constant 0 : i32
    return %arg0, %c0_i32 : i32, i32
  }
  func.func @transform_6(%arg0: i32) -> (i32, i32) {
    %c0_i32 = arith.constant 0 : i32
    %c0_i32_0 = arith.constant 0 : i32
    return %arg0, %c0_i32 : i32, i32
  }
}

</mosaic_0001>

<llo_original>
// kernel: _vp_project.1
$region0: #{_vp_project.1}
  #allocation0 [shape = 'u32[]', space=smem, size = 0x4, offset = 0x4, fixed_abs, tag = 'smem constant byte address 0x4 - core index']
  #allocation1 [shape = 'u32[144,128]{1,0:T(1,128)}', space=vmem, size = 0x12000, scoped, tag = 'internal scratch']
  %s0 = inlined_call_operand.vmem [shape: f32[8,128], index: 0, kind: input, shape index: {}]
  %s1 = inlined_call_operand.vmem [shape: f32[128,152], index: 1, kind: input, shape index: {}]
  %s2 = inlined_call_operand.vmem [shape: f32[128,4], index: 2, kind: input, shape index: {}]
  %s3 = inlined_call_operand.vmem [shape: f32[8,128], index: 3, kind: output, shape index: {0}]
  %s4 = inlined_call_operand.vmem [shape: f32[8,24], index: 4, kind: output, shape index: {1}]
  %s5 = inlined_call_operand.vmem [shape: f32[8,128], index: 5, kind: output, shape index: {2}]
  %s6 = inlined_call_operand.vmem [shape: f32[8,4], index: 6, kind: output, shape index: {3}]
  %7 = xla_tuple %s3, %s4, %s5, %s6
  %s8 = sld [smem:[#allocation0]]
  $region46: #{_vp_project.1} parent=0
    _
  %s10 = ssub.s32 1, %s8
  %s11 = scalar_select 0, %s10, %s8
  // Predicated region
  $region2: #{_vp_project.1} parent=0 // pred_check
    _
  $region3: #{_vp_project.1} parent=0 // pred_check_branch
    %13 = sbr.rel (0) target = $region5
  $region4: #{_vp_project.1} parent=0 // pred_region
    _
  $region5: #{_vp_project.1} parent=0 // pred_fallthru
    _
  // Predicated region
  $region6: #{_vp_project.1} parent=0 // pred_check
    _
  $region7: #{_vp_project.1} parent=0 // pred_check_branch
    %15 = sbr.rel (0) target = $region9
  $region8: #{_vp_project.1} parent=0 // pred_region
    _
  $region9: #{_vp_project.1} parent=0 // pred_fallthru
    _
  // Predicated region
  $region10: #{_vp_project.1} parent=0 // pred_check
    _
  $region11: #{_vp_project.1} parent=0 // pred_check_branch
    %17 = sbr.rel (0) target = $region13
  $region12: #{_vp_project.1} parent=0 // pred_region
    _
  $region13: #{_vp_project.1} parent=0 // pred_fallthru
    _
  %v18 = vld [vmem:[%s0] sm:$0xff]
  %v19 = vld [vmem:[%s1] sm:$0xff]
  %v20 = vld [vmem:[%s1 + $0x8] sm:$0xff]
  %v21 = vld [vmem:[%s1 + $0x10] sm:$0xff]
  %v22 = vld [vmem:[%s1 + $0x18] sm:$0xff]
  %v23 = vld [vmem:[%s1 + $0x20] sm:$0xff]
  %v24 = vld [vmem:[%s1 + $0x28] sm:$0xff]
  %v25 = vld [vmem:[%s1 + $0x30] sm:$0xff]
  %v26 = vld [vmem:[%s1 + $0x38] sm:$0xff]
  %v27 = vld [vmem:[%s1 + $0x40] sm:$0xff]
  %v28 = vld [vmem:[%s1 + $0x48] sm:$0xff]
  %v29 = vld [vmem:[%s1 + $0x50] sm:$0xff]
  %v30 = vld [vmem:[%s1 + $0x58] sm:$0xff]
  %v31 = vld [vmem:[%s1 + $0x60] sm:$0xff]
  %v32 = vld [vmem:[%s1 + $0x68] sm:$0xff]
  %v33 = vld [vmem:[%s1 + $0x70] sm:$0xff]
  %v34 = vld [vmem:[%s1 + $0x78] sm:$0xff]
  %v35 = vld [vmem:[%s1 + $0x80] sm:$0xff]
  %v36 = vld [vmem:[%s1 + $0x88] sm:$0xff]
  %v37 = vld [vmem:[%s1 + $0x90] sm:$0xff]
  %v38 = vld [vmem:[%s1 + $0x98] sm:$0xff]
  %v39 = vld [vmem:[%s1 + $0xa0] sm:$0xff]
  %v40 = vld [vmem:[%s1 + $0xa8] sm:$0xff]
  %v41 = vld [vmem:[%s1 + $0xb0] sm:$0xff]
  %v42 = vld [vmem:[%s1 + $0xb8] sm:$0xff]
  %v43 = vld [vmem:[%s1 + $0xc0] sm:$0xff]
  %v44 = vld [vmem:[%s1 + $0xc8] sm:$0xff]
  %v45 = vld [vmem:[%s1 + $0xd0] sm:$0xff]
  %v46 = vld [vmem:[%s1 + $0xd8] sm:$0xff]
  %v47 = vld [vmem:[%s1 + $0xe0] sm:$0xff]
  %v48 = vld [vmem:[%s1 + $0xe8] sm:$0xff]
  %v49 = vld [vmem:[%s1 + $0xf0] sm:$0xff]
  %v50 = vld [vmem:[%s1 + $0xf8] sm:$0xff]
  %51 = vmatprep.subr.mxu0 %v50
  %52 = vmatpush1.msra.mxu0 %v49
  %53 = vmatprep.subr.mxu0 %v48
  %54 = vmatpush1.msra.mxu0 %v47
  %55 = vmatprep.subr.mxu0 %v46
  %56 = vmatpush1.msra.mxu0 %v45
  %57 = vmatprep.subr.mxu0 %v44
  %58 = vmatpush1.msra.mxu0 %v43
  %59 = vmatprep.subr.mxu0 %v42
  %60 = vmatpush1.msra.mxu0 %v41
  %61 = vmatprep.subr.mxu0 %v40
  %62 = vmatpush1.msra.mxu0 %v39
  %63 = vmatprep.subr.mxu0 %v38
  %64 = vmatpush1.msra.mxu0 %v37
  %65 = vmatprep.subr.mxu0 %v36
  %66 = vmatpush1.msra.mxu0 %v35
  %67 = vmatprep.subr.mxu0 %v34
  %68 = vmatpush1.msra.mxu0 %v33
  %69 = vmatprep.subr.mxu0 %v32
  %70 = vmatpush1.msra.mxu0 %v31
  %71 = vmatprep.subr.mxu0 %v30
  %72 = vmatpush1.msra.mxu0 %v29
  %73 = vmatprep.subr.mxu0 %v28
  %74 = vmatpush1.msra.mxu0 %v27
  %75 = vmatprep.subr.mxu0 %v26
  %76 = vmatpush1.msra.mxu0 %v25
  %77 = vmatprep.subr.mxu0 %v24
  %78 = vmatpush1.msra.mxu0 %v23
  %79 = vmatprep.subr.mxu0 %v22
  %80 = vmatpush1.msra.mxu0 %v21
  %81 = vmatprep.subr.mxu0 %v20
  %82 = vmatpush1.msra.mxu0 %v19
  %83 = vmatprep.subr.mxu0 0.0
  %84 = vmatpush2.msra.mxu0 0.0
  %85 = vmatprep.subr.mxu0 0.0
  %86 = vmatpush2.msra.mxu0 0.0
  %87 = vmatprep.subr.mxu0 0.0
  %88 = vmatpush2.msra.mxu0 0.0
  %89 = vmatprep.subr.mxu0 0.0
  %90 = vmatpush2.msra.mxu0 0.0
  %91 = vmatprep.subr.mxu0 0.0
  %92 = vmatpush2.msra.mxu0 0.0
  %93 = vmatprep.subr.mxu0 0.0
  %94 = vmatpush2.msra.mxu0 0.0
  %95 = vmatprep.subr.mxu0 0.0
  %96 = vmatpush2.msra.mxu0 0.0
  %97 = vmatprep.subr.mxu0 0.0
  %98 = vmatpush2.msra.mxu0 0.0
  %99 = vmatprep.subr.mxu0 0.0
  %100 = vmatpush2.msra.mxu0 0.0
  %101 = vmatprep.subr.mxu0 0.0
  %102 = vmatpush2.msra.mxu0 0.0
  %103 = vmatprep.subr.mxu0 0.0
  %104 = vmatpush2.msra.mxu0 0.0
  %105 = vmatprep.subr.mxu0 0.0
  %106 = vmatpush2.msra.mxu0 0.0
  %107 = vmatprep.subr.mxu0 0.0
  %108 = vmatpush2.msra.mxu0 0.0
  %109 = vmatprep.subr.mxu0 0.0
  %110 = vmatpush2.msra.mxu0 0.0
  %111 = vmatprep.subr.mxu0 0.0
  %112 = vmatpush2.msra.mxu0 0.0
  %113 = vmatprep.subr.mxu0 0.0
  %114 = vmatpush2.msra.mxu0 0.0
  %115 = vmatprep.mubr.f32.mxu0 0.0
  %116 = vmatmul.mubr.f32.gmra.mxu0 %v18
  %v117 = vpop.f32.mrf.mxu0
  %v118 = vadd.f32 0.0, %v117
  %v119 = vpop.f32.mrf.mxu0
  %v120 = vadd.f32 0.0, %v119
  %121 = vdwg.mxu0
  %v122 = vsub.f32 %v18, %v118
  %123 = vst [vmem:[%s3] sm:$0xff] %v118
  %vm124 = vcmask 195584
  %125 = vst.msk [vmem:[%s4] sm:$0xff] %vm124, %v120
  %126 = vst [vmem:[%s5] sm:$0xff] %v122
  %v127 = vmul.f32 %v122, %v122
  %v128 = vld [vmem:[%s2] sm:$0xff]
  %v129 = vld [vmem:[%s2 + $0x8] sm:$0xff]
  %v130 = vld [vmem:[%s2 + $0x10] sm:$0xff]
  %v131 = vld [vmem:[%s2 + $0x18] sm:$0xff]
  %v132 = vld [vmem:[%s2 + $0x20] sm:$0xff]
  %v133 = vld [vmem:[%s2 + $0x28] sm:$0xff]
  %v134 = vld [vmem:[%s2 + $0x30] sm:$0xff]
  %v135 = vld [vmem:[%s2 + $0x38] sm:$0xff]
  %v136 = vld [vmem:[%s2 + $0x40] sm:$0xff]
  %v137 = vld [vmem:[%s2 + $0x48] sm:$0xff]
  %v138 = vld [vmem:[%s2 + $0x50] sm:$0xff]
  %v139 = vld [vmem:[%s2 + $0x58] sm:$0xff]
  %v140 = vld [vmem:[%s2 + $0x60] sm:$0xff]
  %v141 = vld [vmem:[%s2 + $0x68] sm:$0xff]
  %v142 = vld [vmem:[%s2 + $0x70] sm:$0xff]
  %v143 = vld [vmem:[%s2 + $0x78] sm:$0xff]
  %144 = vmatprep.subr.mxu0 0.0
  %145 = vmatpush1.msra.mxu0 %v143
  %146 = vmatprep.subr.mxu0 0.0
  %147 = vmatpush1.msra.mxu0 %v142
  %148 = vmatprep.subr.mxu0 0.0
  %149 = vmatpush1.msra.mxu0 %v141
  %150 = vmatprep.subr.mxu0 0.0
  %151 = vmatpush1.msra.mxu0 %v140
  %152 = vmatprep.subr.mxu0 0.0
  %153 = vmatpush1.msra.mxu0 %v139
  %154 = vmatprep.subr.mxu0 0.0
  %155 = vmatpush1.msra.mxu0 %v138
  %156 = vmatprep.subr.mxu0 0.0
  %157 = vmatpush1.msra.mxu0 %v137
  %158 = vmatprep.subr.mxu0 0.0
  %159 = vmatpush1.msra.mxu0 %v136
  %160 = vmatprep.subr.mxu0 0.0
  %161 = vmatpush1.msra.mxu0 %v135
  %162 = vmatprep.subr.mxu0 0.0
  %163 = vmatpush1.msra.mxu0 %v134
  %164 = vmatprep.subr.mxu0 0.0
  %165 = vmatpush1.msra.mxu0 %v133
  %166 = vmatprep.subr.mxu0 0.0
  %167 = vmatpush1.msra.mxu0 %v132
  %168 = vmatprep.subr.mxu0 0.0
  %169 = vmatpush1.msra.mxu0 %v131
  %170 = vmatprep.subr.mxu0 0.0
  %171 = vmatpush1.msra.mxu0 %v130
  %172 = vmatprep.subr.mxu0 0.0
  %173 = vmatpush1.msra.mxu0 %v129
  %174 = vmatprep.subr.mxu0 0.0
  %175 = vmatpush1.msra.mxu0 %v128
  %176 = vmatprep.subr.mxu0 0.0
  %177 = vmatpush2.msra.mxu0 0.0
  %178 = vmatprep.subr.mxu0 0.0
  %179 = vmatpush2.msra.mxu0 0.0
  %180 = vmatprep.subr.mxu0 0.0
  %181 = vmatpush2.msra.mxu0 0.0
  %182 = vmatprep.subr.mxu0 0.0
  %183 = vmatpush2.msra.mxu0 0.0
  %184 = vmatprep.subr.mxu0 0.0
  %185 = vmatpush2.msra.mxu0 0.0
  %186 = vmatprep.subr.mxu0 0.0
  %187 = vmatpush2.msra.mxu0 0.0
  %188 = vmatprep.subr.mxu0 0.0
  %189 = vmatpush2.msra.mxu0 0.0
  %190 = vmatprep.subr.mxu0 0.0
  %191 = vmatpush2.msra.mxu0 0.0
  %192 = vmatprep.subr.mxu0 0.0
  %193 = vmatpush2.msra.mxu0 0.0
  %194 = vmatprep.subr.mxu0 0.0
  %195 = vmatpush2.msra.mxu0 0.0
  %196 = vmatprep.subr.mxu0 0.0
  %197 = vmatpush2.msra.mxu0 0.0
  %198 = vmatprep.subr.mxu0 0.0
  %199 = vmatpush2.msra.mxu0 0.0
  %200 = vmatprep.subr.mxu0 0.0
  %201 = vmatpush2.msra.mxu0 0.0
  %202 = vmatprep.subr.mxu0 0.0
  %203 = vmatpush2.msra.mxu0 0.0
  %204 = vmatprep.subr.mxu0 0.0
  %205 = vmatpush2.msra.mxu0 0.0
  %206 = vmatprep.subr.mxu0 0.0
  %207 = vmatpush2.msra.mxu0 0.0
  %208 = vmatprep.mubr.f32.mxu0 0.0
  %209 = vmatmul.mubr.f32.gmra.mxu0 %v127
  %v210 = vpop.f32.mrf.mxu0
  %v211 = vadd.f32 0.0, %v210
  %v212 = vpop.f32.mrf.mxu0
  %213 = vdwg.mxu0
  %vm214 = vcmask 31744
  %215 = vst.msk [vmem:[%s6] sm:$0xff] %vm214, %v211
  // Predicated region
  $region14: #{_vp_project.1} parent=0 // pred_check
    _
  $region15: #{_vp_project.1} parent=0 // pred_check_branch
    %217 = sbr.rel (0) target = $region17
  $region16: #{_vp_project.1} parent=0 // pred_region
    _
  $region17: #{_vp_project.1} parent=0 // pred_fallthru
    _
  // Predicated region
  $region18: #{_vp_project.1} parent=0 // pred_check
    _
  $region19: #{_vp_project.1} parent=0 // pred_check_branch
    %219 = sbr.rel (0) target = $region21
  $region20: #{_vp_project.1} parent=0 // pred_region
    _
  $region21: #{_vp_project.1} parent=0 // pred_fallthru
    _
  // Predicated region
  $region22: #{_vp_project.1} parent=0 // pred_check
    _
  $region23: #{_vp_project.1} parent=0 // pred_check_branch
    %221 = sbr.rel (0) target = $region25
  $region24: #{_vp_project.1} parent=0 // pred_region
    _
  $region25: #{_vp_project.1} parent=0 // pred_fallthru
    _
  // Predicated region
  $region26: #{_vp_project.1} parent=0 // pred_check
    _
  $region27: #{_vp_project.1} parent=0 // pred_check_branch
    %223 = sbr.rel (0) target = $region29
  $region28: #{_vp_project.1} parent=0 // pred_region
    _
  $region29: #{_vp_project.1} parent=0 // pred_fallthru
    _
  // Predicated region
  $region30: #{_vp_project.1} parent=0 // pred_check
    _
  $region31: #{_vp_project.1} parent=0 // pred_check_branch
    %225 = sbr.rel (0) target = $region33
  $region32: #{_vp_project.1} parent=0 // pred_region
    _
  $region33: #{_vp_project.1} parent=0 // pred_fallthru
    _
  // Predicated region
  $region34: #{_vp_project.1} parent=0 // pred_check
    _
  $region35: #{_vp_project.1} parent=0 // pred_check_branch
    %227 = sbr.rel (0) target = $region37
  $region36: #{_vp_project.1} parent=0 // pred_region
    _
  $region37: #{_vp_project.1} parent=0 // pred_fallthru
    _
  // Predicated region
  $region38: #{_vp_project.1} parent=0 // pred_check
    _
  $region39: #{_vp_project.1} parent=0 // pred_check_branch
    %229 = sbr.rel (0) target = $region41
  $region40: #{_vp_project.1} parent=0 // pred_region
    _
  $region41: #{_vp_project.1} parent=0 // pred_fallthru
    _
  // Predicated region
  $region42: #{_vp_project.1} parent=0 // pred_check
    _
  $region43: #{_vp_project.1} parent=0 // pred_check_branch
    %231 = sbr.rel (0) target = $region45
  $region44: #{_vp_project.1} parent=0 // pred_region
    _
  $region45: #{_vp_project.1} parent=0 // pred_fallthru
    _

</llo_original>
